<compile_context>
chip_gen: v5e
topology: v5e:2x2
jax: 0.10.0
libtpu: 0.0.40
codegen_flags: <defaults>
</compile_context>

<pallas_src>
import copy
import functools

import numpy as np
import jax
import jax.numpy as jnp
from jax.experimental import pallas as pl
from jax.experimental.pallas import tpu as pltpu

LOG_ZERO = -10000000.0
NEG_BIG = -1.0e7      # bias for padded vocab lanes (never wins max, exp -> 0)
NEG_INIT = -1.0e30    # finite "-inf" for the running max (avoids inf arithmetic)


def _round_up(x, m):
    return ((x + m - 1) // m) * m


def _vmem_budget_bytes():
    """Physical VMEM minus >=16 MiB headroom (48 MiB on v7x, 112 MiB on v5e/v6e)."""
    try:
        phys = int(pltpu.get_tpu_info().vmem_capacity_bytes)
    except Exception:
        phys = 64 * 1024 * 1024   # conservative (v7x per-TensorCore VMEM)
    return max(32 * 1024 * 1024, phys - 16 * 1024 * 1024)


def _bspec(shape, index_map, buffers=None):
    """BlockSpec with optional pipeline_mode=pl.Buffered(n); falls back cleanly."""
    if buffers is not None:
        try:
            return pl.BlockSpec(shape, index_map, pipeline_mode=pl.Buffered(buffers))
        except Exception:
            pass
    return pl.BlockSpec(shape, index_map)


def _choose_tiles(dp, vp128, itemsize, budget_bytes):
    """Pick (tile_t, tile_v) so the per-step working set fits the VMEM budget."""
    tile_v = min(1024, vp128)     # lane-dense, multiple of 128 (MXU N dim)
    tile_t = 256                  # multiple of 16 (bf16 sublane packing)

    def step_bytes(tt, tv):
        return (2 * dp * tv * itemsize       # W tile (worst case double-buffered)
                + 2 * 8 * tv * 4             # bias tile
                + 2 * tt * dp * itemsize     # x tile
                + 2 * tt * tv * 4            # f32 output tile
                + 4 * tt * 128 * 4)          # lse + running max/sum scratch

    while tile_t > 16 and step_bytes(tile_t, tile_v) > budget_bytes:
        tile_t //= 2
    while tile_v > 128 and step_bytes(tile_t, tile_v) > budget_bytes:
        tile_v //= 2
    return tile_t, tile_v


# ----------------------------------------------------------------------------
# Pallas kernels
# ----------------------------------------------------------------------------
def _ctc_lse_kernel(x_ref, w_ref, b_ref, lse_ref, m_sc, s_sc):
    """Pass 1: streaming (online) log-sum-exp of x@W+b over the vocab axis."""
    j = pl.program_id(1)

    @pl.when(j == 0)
    def _init():
        m_sc[...] = jnp.full_like(m_sc, NEG_INIT)
        s_sc[...] = jnp.zeros_like(s_sc)

    logits = jnp.dot(x_ref[...], w_ref[...],
                     preferred_element_type=jnp.float32) + b_ref[...]
    m_prev = m_sc[...]
    m_new = jnp.maximum(m_prev, jnp.max(logits, axis=-1, keepdims=True))
    s_sc[...] = (s_sc[...] * jnp.exp(m_prev - m_new)
                 + jnp.sum(jnp.exp(logits - m_new), axis=-1, keepdims=True))
    m_sc[...] = m_new

    @pl.when(j == pl.num_programs(1) - 1)
    def _finalize():
        lse_ref[...] = m_sc[...] + jnp.log(s_sc[...])


def _ctc_logp_kernel(x_ref, w_ref, b_ref, lse_ref, o_ref):
    """Pass 2: recompute logits tile and write log-probs = logits - lse."""
    logits = jnp.dot(x_ref[...], w_ref[...],
                     preferred_element_type=jnp.float32) + b_ref[...]
    o_ref[...] = logits - lse_ref[...]


@functools.partial(
    jax.jit, static_argnames=("tile_t", "tile_v", "tp", "dp", "vmem_limit"))
def _ctc_logprobs_impl(feat_td, w_pad, b_pad, *, tile_t, tile_v, tp, dp, vmem_limit):
    """feat_td: (T, D); w_pad: (Dp, Vp); b_pad: (1, Vp) -> padded log-probs (Tp, Vp) f32."""
    T, D = feat_td.shape
    vp = w_pad.shape[1]
    num_t = tp // tile_t
    num_v = vp // tile_v

    x = feat_td.astype(w_pad.dtype)                 # bf16 at realistic sizes
    x = jnp.pad(x, ((0, tp - T), (0, dp - D)))      # zero-pad time rows + D

    x_bytes = tp * dp * x.dtype.itemsize
    w_bytes = dp * vp * w_pad.dtype.itemsize
    b_bytes = vp * 4
    o_bytes = tp * vp * 4
    lse_bytes = tp * 4
    flops = 2 * tp * dp * vp

    # ---- pass 1: per-row LSE, vocab axis streamed (grid = (T tiles, V tiles)) ----
    lse = pl.pallas_call(
        _ctc_lse_kernel,
        out_shape=jax.ShapeDtypeStruct((tp, 1), jnp.float32),
        grid=(num_t, num_v),
        in_specs=[
            _bspec((tile_t, dp), lambda i, j: (i, 0), buffers=1),  # x: constant over j
            _bspec((dp, tile_v), lambda i, j: (0, j)),             # W: streams over V
            _bspec((1, tile_v), lambda i, j: (0, j)),              # bias
        ],
        out_specs=pl.BlockSpec((tile_t, 1), lambda i, j: (i, 0)),
        scratch_shapes=[pltpu.VMEM((tile_t, 1), jnp.float32),      # running max
                        pltpu.VMEM((tile_t, 1), jnp.float32)],     # running exp-sum
        compiler_params=pltpu.CompilerParams(
            dimension_semantics=("parallel", "arbitrary"),
            vmem_limit_bytes=vmem_limit),
        cost_estimate=pl.CostEstimate(
            flops=flops, transcendentals=tp * vp,
            bytes_accessed=x_bytes + num_t * (w_bytes + b_bytes) + lse_bytes),
    )(x, w_pad, b_pad)

    # ---- pass 2: recompute logits (cheaper than round-tripping a (Tp,Vp) f32
    #      intermediate through HBM for typical decode lengths) and subtract lse.
    #      V is the outer grid axis so W / bias tiles are loaded once each. ----
    logp = pl.pallas_call(
        _ctc_logp_kernel,
        out_shape=jax.ShapeDtypeStruct((tp, vp), jnp.float32),
        grid=(num_v, num_t),
        in_specs=[
            _bspec((tile_t, dp), lambda j, i: (i, 0)),             # x
            _bspec((dp, tile_v), lambda j, i: (0, j), buffers=1),  # W: constant over i
            _bspec((1, tile_v), lambda j, i: (0, j), buffers=1),   # bias: constant over i
            _bspec((tile_t, 1), lambda j, i: (i, 0)),              # lse
        ],
        out_specs=pl.BlockSpec((tile_t, tile_v), lambda j, i: (i, j)),
        compiler_params=pltpu.CompilerParams(
            dimension_semantics=("parallel", "arbitrary"),
            vmem_limit_bytes=vmem_limit),
        cost_estimate=pl.CostEstimate(
            flops=flops, transcendentals=0,
            bytes_accessed=num_v * x_bytes + w_bytes + b_bytes + o_bytes + lse_bytes),
    )(x, w_pad, b_pad, lse)
    return logp


class PallasCTCHead:
    """Device-resident CTC projection head: log_softmax(x @ W + b).

    Weight padding / casting is done ONCE here (hoisted out of the per-utterance
    path).  __call__ returns the PADDED (Tp, Vp) f32 log-probs; slice on host.
    """

    def __init__(self, w, b):
        w = jnp.asarray(w, dtype=jnp.float32)
        b = jnp.asarray(b, dtype=jnp.float32).reshape(1, -1)
        self.D, self.V = int(w.shape[0]), int(w.shape[1])

        # bf16 MXU operands only pay off at realistic encoder / vocab sizes;
        # all log-softmax math stays f32 inside the kernels either way.
        # TODO(synk): optionally int8 (v5e/v6e) / fp8 (v7x) weights, gated on chip.
        self.use_bf16 = (self.D >= 512) and (self.V >= 1024)
        itemsize = 2 if self.use_bf16 else 4

        self.vmem_limit = _vmem_budget_bytes()
        self.Dp = max(128, _round_up(self.D, 128))
        vp128 = max(128, _round_up(self.V, 128))
        self.tile_t_max, self.tile_v = _choose_tiles(
            self.Dp, vp128, itemsize, self.vmem_limit)
        self.Vp = _round_up(vp128, self.tile_v)

        # ---- pad & cast once ----
        w = jnp.pad(w, ((0, self.Dp - self.D), (0, self.Vp - self.V)))
        b = jnp.pad(b, ((0, 0), (0, self.Vp - self.V)), constant_values=NEG_BIG)
        if self.use_bf16:
            w = w.astype(jnp.bfloat16)
        self.w_pad = jax.device_put(w)
        self.b_pad = jax.device_put(b)

    def __call__(self, feat_td):
        T, D = feat_td.shape
        assert D == self.D
        tile_t = min(self.tile_t_max, max(16, _round_up(T, 16)))
        tp = _round_up(T, tile_t)
        return _ctc_logprobs_impl(
            feat_td, self.w_pad, self.b_pad,
            tile_t=int(tile_t), tile_v=int(self.tile_v),
            tp=int(tp), dp=int(self.Dp), vmem_limit=int(self.vmem_limit))


# ----------------------------------------------------------------------------
# CTC hypothesis (exact port of the PyTorch reference, numpy only)
# ----------------------------------------------------------------------------
class CTCHypothesis:
    def __init__(self):
        self.y = []
        self.Pr_y_t_blank = 0.0
        self.Pr_y_t_nblank = LOG_ZERO
        self.Pr_y_t_blank_bkup = 0.0
        self.Pr_y_t_nblank_bkup = LOG_ZERO
        self.updated_lm = False

    def get_len(self):
        return len(self.y)

    def get_string(self):
        return ''.join([str(s) for s in self.y])

    def get_score(self):
        return np.logaddexp(self.Pr_y_t_blank, self.Pr_y_t_nblank)

    def get_final_score(self):
        if len(self.y) > 0:
            return np.logaddexp(self.Pr_y_t_blank, self.Pr_y_t_nblank) / len(self.y)
        return np.logaddexp(self.Pr_y_t_blank, self.Pr_y_t_nblank)

    def check_same(self, y_2):
        if len(self.y) != len(y_2):
            return False
        for i in range(len(self.y)):
            if self.y[i] != y_2[i]:
                return False
        return True

    def update_Pr_nblank(self, ctc_y_t):
        self.Pr_y_t_nblank += ctc_y_t

    def update_Pr_nblank_prefix(self, ctc_y_t, Pr_y_t_blank_prefix,
                                Pr_y_t_nblank_prefix, Pr_ye_y=None):
        lm_prob = Pr_ye_y if Pr_ye_y is not None else 0.0
        if len(self.y) == 0:
            return
        if len(self.y) == 1:
            Pr_ye_y_prefix = ctc_y_t + lm_prob + np.logaddexp(
                Pr_y_t_blank_prefix, Pr_y_t_nblank_prefix)
        else:
            Pr_ye_y_prefix = ctc_y_t + lm_prob + (
                Pr_y_t_blank_prefix if self.y[-1] == self.y[-2]
                else np.logaddexp(Pr_y_t_blank_prefix, Pr_y_t_nblank_prefix))
        self.Pr_y_t_nblank = np.logaddexp(self.Pr_y_t_nblank, Pr_ye_y_prefix)

    def update_Pr_blank(self, ctc_blank_t):
        self.Pr_y_t_blank = np.logaddexp(self.Pr_y_t_nblank_bkup,
                                         self.Pr_y_t_blank_bkup) + ctc_blank_t

    def add_token(self, token, ctc_token_t, Pr_k_y=None):
        lm_prob = Pr_k_y if Pr_k_y is not None else 0.0
        if len(self.y) == 0:
            Pr_y_t_nblank_new = ctc_token_t + lm_prob + np.logaddexp(
                self.Pr_y_t_blank_bkup, self.Pr_y_t_nblank_bkup)
        else:
            Pr_y_t_nblank_new = ctc_token_t + lm_prob + (
                self.Pr_y_t_blank_bkup if self.y[-1] == token
                else np.logaddexp(self.Pr_y_t_blank_bkup, self.Pr_y_t_nblank_bkup))
        self.Pr_y_t_blank = LOG_ZERO
        self.Pr_y_t_nblank = Pr_y_t_nblank_new
        self.Pr_y_t_blank_bkup = self.Pr_y_t_blank
        self.Pr_y_t_nblank_bkup = self.Pr_y_t_nblank
        self.y.append(token)

    def orig_backup(self):
        self.Pr_y_t_blank_bkup = self.Pr_y_t_blank
        self.Pr_y_t_nblank_bkup = self.Pr_y_t_nblank


# ----------------------------------------------------------------------------
# CTCBeamDecoder (lm_weight = 0.0 -> apply_lm == False, as in default config)
# ----------------------------------------------------------------------------
class CTCBeamDecoder:
    def __init__(self, ctc_w, ctc_b, vocab_range, beam_size, vocab_candidate):
        # Synthetic ASR stand-in: a linear CTC head (the real model takes an
        # external `asr` module here).
        # TODO(synk): full ASR encoder (CNN+RNN+attention) is external to this
        # module and is not reproduced; stand-in is a deterministic CTC head.
        self.ctc_head = PallasCTCHead(ctc_w, ctc_b)   # pads / casts weights ONCE
        self.vocab_range = list(vocab_range)
        self.beam_size = beam_size
        self.vocab_cand = vocab_candidate
        assert self.vocab_cand <= len(self.vocab_range)
        self.apply_lm = False

    def forward(self, feat, feat_len):
        assert feat.shape[0] == 1, 'Batchsize == 1 is required for beam search'
        T = int(feat.shape[1])
        V = self.ctc_head.V

        # --- Pallas hot path: CTC head projection + streaming log_softmax ---
        logp_pad = self.ctc_head(feat[0])                    # (Tp, Vp) f32, device
        # single device->host transfer of the padded array; slice in numpy
        # (no device-side column slice -> no extra HBM pass over the output).
        ctc_output = np.asarray(jax.device_get(logp_pad))[:T, :V]

        # host-side per-timestep precomputes (argmax + top-K candidates),
        # replacing the O(B*V log V) per-hypothesis Python sort.
        argmax_t = np.argmax(ctc_output, axis=-1)            # (T,)
        vocab_arr = np.asarray(self.vocab_range, dtype=np.int64)
        cand_scores = ctc_output[:, vocab_arr]               # (T, |range|)
        order = np.argsort(-cand_scores, axis=1, kind='stable')[:, :self.vocab_cand]
        cand_all = vocab_arr[order]                          # (T, vocab_cand)

        B = [CTCHypothesis()]
        start = True
        for t in range(T):
            if argmax_t[t] == 0 and start:
                continue
            else:
                start = False
            B_new = []
            for i in range(len(B)):
                B_i_new = copy.deepcopy(B[i])
                if B_i_new.get_len() > 0:
                    if B_i_new.y[-1] == 1:
                        B_new.append(B_i_new)
                        continue
                    B_i_new.update_Pr_nblank(ctc_output[t, B_i_new.y[-1]])
                    for j in range(len(B)):
                        if i != j and B[j].check_same(B_i_new.y[:-1]):
                            lm_prob = 0.0
                            B_i_new.update_Pr_nblank_prefix(
                                ctc_output[t, B_i_new.y[-1]],
                                B[j].Pr_y_t_blank, B[j].Pr_y_t_nblank, lm_prob)
                            break
                B_i_new.update_Pr_blank(ctc_output[t, 0])
                for j in range(self.vocab_cand):
                    k = int(cand_all[t, j])
                    hyp_yk = copy.deepcopy(B_i_new)
                    hyp_yk.add_token(k, ctc_output[t, k], 0.0)
                    hyp_yk.updated_lm = False
                    B_new.append(hyp_yk)
                B_i_new.orig_backup()
                B_new.append(B_i_new)
            del B
            B = []
            B_new = sorted(B_new, key=lambda x: x.get_string())
            B.append(B_new[0])
            for i in range(1, len(B_new)):
                if B_new[i].check_same(B[-1].y):
                    if B_new[i].get_score() > B[-1].get_score():
                        B[-1] = B_new[i]
                    continue
                else:
                    B.append(B_new[i])
            del B_new
            if t == T - 1:
                B = sorted(B, reverse=True, key=lambda x: x.get_final_score())
            else:
                B = sorted(B, reverse=True, key=lambda x: x.get_score())
            if len(B) > self.beam_size:
                B = B[:self.beam_size]
        return [b.y for b in B]


# ----------------------------------------------------------------------------
if __name__ == "__main__":
    T, D, V = 8, 32, 16     # time steps, encoder dim, vocab size (0 = blank, 1 = <eos>)
    key = jax.random.PRNGKey(0)
    k_feat, k_w, k_b = jax.random.split(key, 3)

    feat = jax.random.normal(k_feat, (1, T, D), dtype=jnp.float32)   # (B=1, T, D)
    feat_len = jnp.array([T], dtype=jnp.int32)
    ctc_w = jax.random.normal(k_w, (D, V), dtype=jnp.float32) * 0.1
    ctc_b = jax.random.normal(k_b, (1, V), dtype=jnp.float32) * 0.1

    decoder = CTCBeamDecoder(ctc_w, ctc_b,
                             vocab_range=range(2, V),
                             beam_size=3,
                             vocab_candidate=3)

    # Run the Pallas kernels once and block on the result.
    logp_pad = decoder.ctc_head(feat[0])
    jax.block_until_ready(logp_pad)

    # Correctness check against a plain-JAX reference (f32 path at these sizes).
    ref = jax.nn.log_softmax(feat[0] @ ctc_w + ctc_b, axis=-1)
    np.testing.assert_allclose(np.asarray(logp_pad)[:T, :V], np.asarray(ref),
                               rtol=2e-4, atol=2e-4)

    hyps = decoder.forward(feat, feat_len)
    assert isinstance(hyps, list) and len(hyps) >= 1
    print("KERNEL_OK")
</pallas_src>

<mosaic_0001>
module attributes {stable_mosaic.version = 11 : i64} {
  func.func @_ctc_logp_kernel(%arg0: i32, %arg1: i32, %arg2: memref<16x128xf32, #tpu.memory_space<vmem>>, %arg3: memref<128x128xf32, #tpu.memory_space<vmem>>, %arg4: memref<1x128xf32, #tpu.memory_space<vmem>>, %arg5: memref<16x1xf32, #tpu.memory_space<vmem>>, %arg6: memref<16x128xf32, #tpu.memory_space<vmem>>) attributes {dimension_semantics = [#tpu.dimension_semantics<parallel>, #tpu.dimension_semantics<arbitrary>], iteration_bounds = array<i64: 1, 1>, scalar_prefetch = 0 : i64, scratch_operands = 0 : i64, tpu.core_type = #tpu.core_type<tc>, window_params = [{transform_indices = @transform_0, window_bounds = array<i64: 16, 128>}, {pipeline_mode = #tpu.pipeline_mode<synchronous>, transform_indices = @transform_1, window_bounds = array<i64: 128, 128>}, {pipeline_mode = #tpu.pipeline_mode<synchronous>, transform_indices = @transform_2, window_bounds = array<i64: 1, 128>}, {transform_indices = @transform_3, window_bounds = array<i64: 16, 1>}, {transform_indices = @transform_4, window_bounds = array<i64: 16, 128>}]} {
    %c0 = arith.constant 0 : index
    %c0_0 = arith.constant 0 : index
    %0 = vector.load %arg2[%c0, %c0_0] : memref<16x128xf32, #tpu.memory_space<vmem>>, vector<16x128xf32>
    %c0_1 = arith.constant 0 : index
    %c0_2 = arith.constant 0 : index
    %1 = vector.load %arg3[%c0_1, %c0_2] : memref<128x128xf32, #tpu.memory_space<vmem>>, vector<128x128xf32>
    %cst = arith.constant dense<0.000000e+00> : vector<16x128xf32>
    %2 = tpu.matmul %0, %1, %cst {dimension_numbers = #tpu.dot_dimension_numbers<[1], [0], [0], [1], [0, 0, 1, 1], [], []>} : vector<16x128xf32>, vector<128x128xf32>, vector<16x128xf32> -> vector<16x128xf32>
    %c0_3 = arith.constant 0 : index
    %c0_4 = arith.constant 0 : index
    %3 = vector.load %arg4[%c0_3, %c0_4] : memref<1x128xf32, #tpu.memory_space<vmem>>, vector<1x128xf32>
    %4 = vector.broadcast %3 : vector<1x128xf32> to vector<16x128xf32>
    %5 = arith.addf %2, %4 : vector<16x128xf32>
    %c0_5 = arith.constant 0 : index
    %c0_6 = arith.constant 0 : index
    %6 = vector.load %arg5[%c0_5, %c0_6] : memref<16x1xf32, #tpu.memory_space<vmem>>, vector<16x1xf32>
    %7 = vector.broadcast %6 : vector<16x1xf32> to vector<16x128xf32>
    %8 = arith.subf %5, %7 : vector<16x128xf32>
    %c0_7 = arith.constant 0 : index
    %c0_8 = arith.constant 0 : index
    %9 = vector.load %arg6[%c0_7, %c0_8] : memref<16x128xf32, #tpu.memory_space<vmem>>, vector<16x128xf32>
    tpu.vector_store %arg6[%c0_7, %c0_8], %8 {strides = array<i32>} : memref<16x128xf32, #tpu.memory_space<vmem>>, vector<16x128xf32>,
    return
  }
  func.func @transform_0(%arg0: i32, %arg1: i32) -> (i32, i32) {
    %c0_i32 = arith.constant 0 : i32
    %c0_i32_0 = arith.constant 0 : i32
    return %arg1, %c0_i32 : i32, i32
  }
  func.func @transform_1(%arg0: i32, %arg1: i32) -> (i32, i32) {
    %c0_i32 = arith.constant 0 : i32
    %c0_i32_0 = arith.constant 0 : i32
    return %c0_i32, %arg0 : i32, i32
  }
  func.func @transform_2(%arg0: i32, %arg1: i32) -> (i32, i32) {
    %c0_i32 = arith.constant 0 : i32
    %c0_i32_0 = arith.constant 0 : i32
    return %c0_i32, %arg0 : i32, i32
  }
  func.func @transform_3(%arg0: i32, %arg1: i32) -> (i32, i32) {
    %c0_i32 = arith.constant 0 : i32
    %c0_i32_0 = arith.constant 0 : i32
    return %arg1, %c0_i32 : i32, i32
  }
  func.func @transform_4(%arg0: i32, %arg1: i32) -> (i32, i32) {
    %c0_i32 = arith.constant 0 : i32
    return %arg1, %arg0 : i32, i32
  }
}

module attributes {stable_mosaic.version = 11 : i64} {
  func.func @_ctc_lse_kernel(%arg0: i32, %arg1: i32, %arg2: memref<16x128xf32, #tpu.memory_space<vmem>>, %arg3: memref<128x128xf32, #tpu.memory_space<vmem>>, %arg4: memref<1x128xf32, #tpu.memory_space<vmem>>, %arg5: memref<16x1xf32, #tpu.memory_space<vmem>>, %arg6: memref<16x1xf32, #tpu.memory_space<vmem>>, %arg7: memref<16x1xf32, #tpu.memory_space<vmem>>) attributes {dimension_semantics = [#tpu.dimension_semantics<parallel>, #tpu.dimension_semantics<arbitrary>], iteration_bounds = array<i64: 1, 1>, scalar_prefetch = 0 : i64, scratch_operands = 2 : i64, tpu.core_type = #tpu.core_type<tc>, window_params = [{pipeline_mode = #tpu.pipeline_mode<synchronous>, transform_indices = @transform_0, window_bounds = array<i64: 16, 128>}, {transform_indices = @transform_1, window_bounds = array<i64: 128, 128>}, {transform_indices = @transform_2, window_bounds = array<i64: 1, 128>}, {transform_indices = @transform_3, window_bounds = array<i64: 16, 1>}]} {
    %c0_i32 = arith.constant 0 : i32
    %0 = arith.cmpi eq, %arg1, %c0_i32 : i32
    %1 = arith.extui %0 : i1 to i32
    %c0_i32_0 = arith.constant 0 : i32
    %2 = arith.cmpi ne, %1, %c0_i32_0 : i32
    scf.if %2 {
      %cst_18 = arith.constant -1.000000e+30 : f32
      %28 = vector.broadcast %cst_18 : f32 to vector<16x1xf32>
      %c0_19 = arith.constant 0 : index
      %c0_20 = arith.constant 0 : index
      %29 = vector.load %arg6[%c0_19, %c0_20] : memref<16x1xf32, #tpu.memory_space<vmem>>, vector<16x1xf32>
      tpu.vector_store %arg6[%c0_19, %c0_20], %28 {strides = array<i32>} : memref<16x1xf32, #tpu.memory_space<vmem>>, vector<16x1xf32>,
      %cst_21 = arith.constant 0.000000e+00 : f32
      %30 = vector.broadcast %cst_21 : f32 to vector<16x1xf32>
      %c0_22 = arith.constant 0 : index
      %c0_23 = arith.constant 0 : index
      %31 = vector.load %arg7[%c0_22, %c0_23] : memref<16x1xf32, #tpu.memory_space<vmem>>, vector<16x1xf32>
      tpu.vector_store %arg7[%c0_22, %c0_23], %30 {strides = array<i32>} : memref<16x1xf32, #tpu.memory_space<vmem>>, vector<16x1xf32>,
    } else {
    }
    %c0 = arith.constant 0 : index
    %c0_1 = arith.constant 0 : index
    %3 = vector.load %arg2[%c0, %c0_1] : memref<16x128xf32, #tpu.memory_space<vmem>>, vector<16x128xf32>
    %c0_2 = arith.constant 0 : index
    %c0_3 = arith.constant 0 : index
    %4 = vector.load %arg3[%c0_2, %c0_3] : memref<128x128xf32, #tpu.memory_space<vmem>>, vector<128x128xf32>
    %cst = arith.constant dense<0.000000e+00> : vector<16x128xf32>
    %5 = tpu.matmul %3, %4, %cst {dimension_numbers = #tpu.dot_dimension_numbers<[1], [0], [0], [1], [0, 0, 1, 1], [], []>} : vector<16x128xf32>, vector<128x128xf32>, vector<16x128xf32> -> vector<16x128xf32>
    %c0_4 = arith.constant 0 : index
    %c0_5 = arith.constant 0 : index
    %6 = vector.load %arg4[%c0_4, %c0_5] : memref<1x128xf32, #tpu.memory_space<vmem>>, vector<1x128xf32>
    %7 = vector.broadcast %6 : vector<1x128xf32> to vector<16x128xf32>
    %8 = arith.addf %5, %7 : vector<16x128xf32>
    %c0_6 = arith.constant 0 : index
    %c0_7 = arith.constant 0 : index
    %9 = vector.load %arg6[%c0_6, %c0_7] : memref<16x1xf32, #tpu.memory_space<vmem>>, vector<16x1xf32>
    %cst_8 = arith.constant dense<0xFF800000> : vector<16xf32>
    %10 = vector.multi_reduction <maximumf>, %8, %cst_8 [1] : vector<16x128xf32> to vector<16xf32>
    %11 = vector.shape_cast %10 : vector<16xf32> to vector<16x1xf32>
    %12 = arith.maximumf %9, %11 : vector<16x1xf32>
    %c0_9 = arith.constant 0 : index
    %c0_10 = arith.constant 0 : index
    %13 = vector.load %arg7[%c0_9, %c0_10] : memref<16x1xf32, #tpu.memory_space<vmem>>, vector<16x1xf32>
    %14 = arith.subf %9, %12 : vector<16x1xf32>
    %15 = math.exp %14 : vector<16x1xf32>
    %16 = arith.mulf %13, %15 : vector<16x1xf32>
    %17 = vector.broadcast %12 : vector<16x1xf32> to vector<16x128xf32>
    %18 = arith.subf %8, %17 : vector<16x128xf32>
    %19 = math.exp %18 : vector<16x128xf32>
    %cst_11 = arith.constant dense<0.000000e+00> : vector<16xf32>
    %20 = vector.multi_reduction <add>, %19, %cst_11 [1] : vector<16x128xf32> to vector<16xf32>
    %21 = vector.shape_cast %20 : vector<16xf32> to vector<16x1xf32>
    %22 = arith.addf %16, %21 : vector<16x1xf32>
    %c0_12 = arith.constant 0 : index
    %c0_13 = arith.constant 0 : index
    %23 = vector.load %arg7[%c0_12, %c0_13] : memref<16x1xf32, #tpu.memory_space<vmem>>, vector<16x1xf32>
    tpu.vector_store %arg7[%c0_12, %c0_13], %22 {strides = array<i32>} : memref<16x1xf32, #tpu.memory_space<vmem>>, vector<16x1xf32>,
    %c0_14 = arith.constant 0 : index
    %c0_15 = arith.constant 0 : index
    %24 = vector.load %arg6[%c0_14, %c0_15] : memref<16x1xf32, #tpu.memory_space<vmem>>, vector<16x1xf32>
    tpu.vector_store %arg6[%c0_14, %c0_15], %12 {strides = array<i32>} : memref<16x1xf32, #tpu.memory_space<vmem>>, vector<16x1xf32>,
    %c0_i32_16 = arith.constant 0 : i32
    %25 = arith.cmpi eq, %arg1, %c0_i32_16 : i32
    %26 = arith.extui %25 : i1 to i32
    %c0_i32_17 = arith.constant 0 : i32
    %27 = arith.cmpi ne, %26, %c0_i32_17 : i32
    scf.if %27 {
      %c0_18 = arith.constant 0 : index
      %c0_19 = arith.constant 0 : index
      %28 = vector.load %arg6[%c0_18, %c0_19] : memref<16x1xf32, #tpu.memory_space<vmem>>, vector<16x1xf32>
      %c0_20 = arith.constant 0 : index
      %c0_21 = arith.constant 0 : index
      %29 = vector.load %arg7[%c0_20, %c0_21] : memref<16x1xf32, #tpu.memory_space<vmem>>, vector<16x1xf32>
      %30 = math.log %29 : vector<16x1xf32>
      %31 = arith.addf %28, %30 : vector<16x1xf32>
      %c0_22 = arith.constant 0 : index
      %c0_23 = arith.constant 0 : index
      %32 = vector.load %arg5[%c0_22, %c0_23] : memref<16x1xf32, #tpu.memory_space<vmem>>, vector<16x1xf32>
      tpu.vector_store %arg5[%c0_22, %c0_23], %31 {strides = array<i32>} : memref<16x1xf32, #tpu.memory_space<vmem>>, vector<16x1xf32>,
    } else {
    }
    return
  }
  func.func @transform_0(%arg0: i32, %arg1: i32) -> (i32, i32) {
    %c0_i32 = arith.constant 0 : i32
    %c0_i32_0 = arith.constant 0 : i32
    return %arg0, %c0_i32 : i32, i32
  }
  func.func @transform_1(%arg0: i32, %arg1: i32) -> (i32, i32) {
    %c0_i32 = arith.constant 0 : i32
    %c0_i32_0 = arith.constant 0 : i32
    return %c0_i32, %arg1 : i32, i32
  }
  func.func @transform_2(%arg0: i32, %arg1: i32) -> (i32, i32) {
    %c0_i32 = arith.constant 0 : i32
    %c0_i32_0 = arith.constant 0 : i32
    return %c0_i32, %arg1 : i32, i32
  }
  func.func @transform_3(%arg0: i32, %arg1: i32) -> (i32, i32) {
    %c0_i32 = arith.constant 0 : i32
    %c0_i32_0 = arith.constant 0 : i32
    return %arg0, %c0_i32 : i32, i32
  }
}

</mosaic_0001>

<llo_original>
// kernel: _ctc_logprobs_impl.2
$region0: #{_ctc_logprobs_impl.2}
  #allocation0 [shape = 'u32[]', space=smem, size = 0x4, offset = 0x4, fixed_abs, tag = 'smem constant byte address 0x4 - core index']
  #allocation1 [shape = 'u32[72,128]{1,0:T(1,128)}', space=vmem, size = 0x9000, scoped, tag = 'internal scratch']
  #allocation2 [shape = 'f32[16,1]{1,0:T(8,128)}', space=vmem, size = 0x2000, scoped, tag = 'scratch operand']
  #allocation3 [shape = 'f32[16,1]{1,0:T(8,128)}', space=vmem, size = 0x2000, scoped, tag = 'scratch operand']
  %s0 = inlined_call_operand.vmem [shape: f32[16,128], index: 0, kind: input, shape index: {}]
  %s1 = inlined_call_operand.hbm [shape: f32[128,128], index: 1, kind: input, shape index: {}]
  %s2 = inlined_call_operand.vmem [shape: f32[1,128], index: 2, kind: input, shape index: {}]
  %s3 = inlined_call_operand.vmem [shape: f32[16,1], index: 3, kind: output, shape index: {}]
  %s4 = sld [smem:[#allocation0]]
  $region34: #{_ctc_logprobs_impl.2} parent=0
    _
  %s6 = ssub.s32 1, %s4
  %s7 = scalar_select 0, %s6, %s4
  $region1: #{_ctc_logprobs_impl.2} parent=0
    #allocation4 [shape = 'u8[65536]{0}', space=vmem, size = 0x10000, scoped, tag = 'input window, operand 1, single buffered']
    #allocation5 [shape = 's32[1]{0}', space=sflag, size = 0x4, scoped, tag = 'scoped memory for _ctc_logprobs_impl.2']
    %8 = vsyncpa [#allocation5], 0
    // Predicated region
    $region2: #{_ctc_logprobs_impl.2} parent=1 // pred_check
      _
    $region3: #{_ctc_logprobs_impl.2} parent=1 // pred_check_branch
      %10 = sbr.rel (0) target = $region5
    $region4: #{_ctc_logprobs_impl.2} parent=1 // pred_region
      _
    $region5: #{_ctc_logprobs_impl.2} parent=1 // pred_fallthru
      _
    // Predicated region
    $region6: #{_ctc_logprobs_impl.2} parent=1 // pred_check
      _
    $region7: #{_ctc_logprobs_impl.2} parent=1 // pred_check_branch
      %12 = sbr.rel (0) target = $region9
    $region8: #{_ctc_logprobs_impl.2} parent=1 // pred_region
      %14 = vsyncadd [#allocation5], 0
      %s15 = sshll.u32 %s1, 4
      %s16 = int_to_ptr.hbm [resolvable:$true] %s15
      %s17 = sshll.u32 [#allocation4], 4
      %s18 = int_to_ptr.vmem [resolvable:$true] %s17
      %23 = dma.hbm_to_vmem [thread:$0]  %s16, 2048, %s18, [#allocation5], 128, 128, 8
    $region9: #{_ctc_logprobs_impl.2} parent=1 // pred_fallthru
      _
    // Predicated region
    $region10: #{_ctc_logprobs_impl.2} parent=1 // pred_check
      _
    $region11: #{_ctc_logprobs_impl.2} parent=1 // pred_check_branch
      %25 = sbr.rel (0) target = $region13
    $region12: #{_ctc_logprobs_impl.2} parent=1 // pred_region
      _
    $region13: #{_ctc_logprobs_impl.2} parent=1 // pred_fallthru
      _
    // Predicated region
    $region14: #{_ctc_logprobs_impl.2} parent=1 // pred_check
      _
    $region15: #{_ctc_logprobs_impl.2} parent=1 // pred_check_branch
      %27 = sbr.rel (0) target = $region17
    $region16: #{_ctc_logprobs_impl.2} parent=1 // pred_region
      %29 = dma.done [#allocation5], 2048
    $region17: #{_ctc_logprobs_impl.2} parent=1 // pred_fallthru
      _
    %p30 = scmp.eq.s32.totalorder 0, 0
    // Predicated region
    $region18: #{_ctc_logprobs_impl.2} parent=1 // pred_check
      %p31 = pneg %p30
    $region19: #{_ctc_logprobs_impl.2} parent=1 // pred_check_branch
      %33 = sbr.rel (%p31) target = $region21
    $region20: #{_ctc_logprobs_impl.2} parent=1 // pred_region
      %vm34 = vcmask 7168
      %35 = vst.msk [vmem:[#allocation2] sm:$0xff] %vm34, -1e+30
      %36 = vst.msk [vmem:[#allocation2 + $0x8] sm:$0xff] %vm34, -1e+30
      %37 = vst.msk [vmem:[#allocation3] sm:$0xff] %vm34, 0.0
      %38 = vst.msk [vmem:[#allocation3 + $0x8] sm:$0xff] %vm34, 0.0
    $region21: #{_ctc_logprobs_impl.2} parent=1 // pred_fallthru
      _
    %v39 = vld [vmem:[%s0] sm:$0xff]
    %v40 = vld [vmem:[%s0 + $0x8] sm:$0xff]
    %v41 = vld [vmem:[#allocation4] sm:$0xff]
    %v42 = vld [vmem:[#allocation4 + $0x8] sm:$0xff]
    %v43 = vld [vmem:[#allocation4 + $0x10] sm:$0xff]
    %v44 = vld [vmem:[#allocation4 + $0x18] sm:$0xff]
    %v45 = vld [vmem:[#allocation4 + $0x20] sm:$0xff]
    %v46 = vld [vmem:[#allocation4 + $0x28] sm:$0xff]
    %v47 = vld [vmem:[#allocation4 + $0x30] sm:$0xff]
    %v48 = vld [vmem:[#allocation4 + $0x38] sm:$0xff]
    %v49 = vld [vmem:[#allocation4 + $0x40] sm:$0xff]
    %v50 = vld [vmem:[#allocation4 + $0x48] sm:$0xff]
    %v51 = vld [vmem:[#allocation4 + $0x50] sm:$0xff]
    %v52 = vld [vmem:[#allocation4 + $0x58] sm:$0xff]
    %v53 = vld [vmem:[#allocation4 + $0x60] sm:$0xff]
    %v54 = vld [vmem:[#allocation4 + $0x68] sm:$0xff]
    %v55 = vld [vmem:[#allocation4 + $0x70] sm:$0xff]
    %v56 = vld [vmem:[#allocation4 + $0x78] sm:$0xff]
    %v57 = vld [vmem:[%s2] sm:$0x1]
    %v59 = vperm.slane %v57, 0
    %61 = vmatpush.msra.mxu0 %v56
    %62 = vmatpush.msra.mxu0 %v55
    %63 = vmatpush.msra.mxu0 %v54
    %64 = vmatpush.msra.mxu0 %v53
    %65 = vmatpush.msra.mxu0 %v52
    %66 = vmatpush.msra.mxu0 %v51
    %67 = vmatpush.msra.mxu0 %v50
    %68 = vmatpush.msra.mxu0 %v49
    %69 = vmatpush.msra.mxu0 %v48
    %70 = vmatpush.msra.mxu0 %v47
    %71 = vmatpush.msra.mxu0 %v46
    %72 = vmatpush.msra.mxu0 %v45
    %73 = vmatpush.msra.mxu0 %v44
    %74 = vmatpush.msra.mxu0 %v43
    %75 = vmatpush.msra.mxu0 %v42
    %76 = vmatpush.msra.mxu0 %v41
    %77 = vmatmul.f32.gmra.mxu0 %v39
    %v78 = vpop.f32.mrf.mxu0
    %v79 = vadd.f32 %v59, %v78
    %80 = vmatmul.f32.gmra.mxu0 %v40
    %v81 = vpop.f32.mrf.mxu0
    %v82 = vadd.f32 %v59, %v81
    %83 = vdwg.mxu0
    %v84 = vld [vmem:[#allocation2] sm:$0xff]
    %v85 = vld [vmem:[#allocation2 + $0x8] sm:$0xff]
    %86 = vmax.xlane.f32.xlu0 %v79
    %v87 = vpop.xlane.xlu0 %86
    %88 = vmax.xlane.f32.xlu0 %v82
    %v89 = vpop.xlane.xlu0 %88
    %v90 = vmax.f32 %v84, %v87
    %v91 = vmax.f32 %v85, %v89
    %v92 = vld [vmem:[#allocation3] sm:$0xff]
    %v93 = vld [vmem:[#allocation3 + $0x8] sm:$0xff]
    %v94 = vsub.f32 %v84, %v90
    %v95 = vsub.f32 %v85, %v91
    %v96 = vmul.f32 %v94, 1.442695
    %v97 = vpow.pop %v96
    %v98 = vmul.f32 %v95, 1.442695
    %v99 = vpow.pop %v98
    %v100 = vmul.f32 %v92, %v97
    %v101 = vmul.f32 %v93, %v99
    %103 = vset.pattern.permute.xlu0 0
    %104 = vperm.xlu0 %103, %v90
    %v105 = vpop.permute.xlu0 %104
    %108 = vset.pattern.permute.xlu0 0
    %109 = vperm.xlu0 %108, %v91
    %v110 = vpop.permute.xlu0 %109
    %v112 = vsub.f32 %v79, %v105
    %v113 = vsub.f32 %v82, %v110
    %v114 = vmul.f32 %v112, 1.442695
    %v115 = vpow.pop %v114
    %v116 = vmul.f32 %v113, 1.442695
    %v117 = vpow.pop %v116
    %118 = vadd.xlane.f32.xlu0 %v115
    %v119 = vpop.xlane.xlu0 %118
    %120 = vadd.xlane.f32.xlu0 %v117
    %v121 = vpop.xlane.xlu0 %120
    %v122 = vadd.f32 %v100, %v119
    %v123 = vadd.f32 %v101, %v121
    %vm124 = vcmask 7168
    %125 = vst.msk [vmem:[#allocation3] sm:$0xff] %vm124, %v122
    %126 = vst.msk [vmem:[#allocation3 + $0x8] sm:$0xff] %vm124, %v123
    %127 = vst.msk [vmem:[#allocation2] sm:$0xff] %vm124, %v90
    %128 = vst.msk [vmem:[#allocation2 + $0x8] sm:$0xff] %vm124, %v91
    // Predicated region
    $region22: #{_ctc_logprobs_impl.2} parent=1 // pred_check
      %p129 = pneg %p30
    $region23: #{_ctc_logprobs_impl.2} parent=1 // pred_check_branch
      %131 = sbr.rel (%p129) target = $region25
    $region24: #{_ctc_logprobs_impl.2} parent=1 // pred_region
      %v132 = vld [vmem:[#allocation2] sm:$0xff]
      %v133 = vld [vmem:[#allocation2 + $0x8] sm:$0xff]
      %v134 = vld [vmem:[#allocation3] sm:$0xff]
      %v135 = vld [vmem:[#allocation3 + $0x8] sm:$0xff]
      %v136 = vlog2.pop %v134
      %v137 = vmul.f32 %v136, 0.6931472
      %v138 = vlog2.pop %v135
      %v139 = vmul.f32 %v138, 0.6931472
      %v140 = vadd.f32 %v132, %v137
      %v141 = vadd.f32 %v133, %v139
      %142 = vst.msk [vmem:[%s3] sm:$0xff] %vm124, %v140
      %143 = vst.msk [vmem:[%s3 + $0x8] sm:$0xff] %vm124, %v141
    $region25: #{_ctc_logprobs_impl.2} parent=1 // pred_fallthru
      _
    // Predicated region
    $region26: #{_ctc_logprobs_impl.2} parent=1 // pred_check
      _
    $region27: #{_ctc_logprobs_impl.2} parent=1 // pred_check_branch
      %145 = sbr.rel (0) target = $region29
    $region28: #{_ctc_logprobs_impl.2} parent=1 // pred_region
      _
    $region29: #{_ctc_logprobs_impl.2} parent=1 // pred_fallthru
      _
    // Predicated region
    $region30: #{_ctc_logprobs_impl.2} parent=1 // pred_check
      _
    $region31: #{_ctc_logprobs_impl.2} parent=1 // pred_check_branch
      %147 = sbr.rel (0) target = $region33
    $region32: #{_ctc_logprobs_impl.2} parent=1 // pred_region
      _
    $region33: #{_ctc_logprobs_impl.2} parent=1 // pred_fallthru
      _
    %148 = vsyncpa [#allocation5], 1

// kernel: _ctc_logprobs_impl.3
$region0: #{_ctc_logprobs_impl.3}
  #allocation0 [shape = 'u32[]', space=smem, size = 0x4, offset = 0x4, fixed_abs, tag = 'smem constant byte address 0x4 - core index']
  #allocation1 [shape = 'u32[72,128]{1,0:T(1,128)}', space=vmem, size = 0x9000, scoped, tag = 'internal scratch']
  %s0 = inlined_call_operand.vmem [shape: f32[16,128], index: 0, kind: input, shape index: {}]
  %s1 = inlined_call_operand.vmem [shape: f32[128,128], index: 1, kind: input, shape index: {}]
  %s2 = inlined_call_operand.vmem [shape: f32[1,128], index: 2, kind: input, shape index: {}]
  %s3 = inlined_call_operand.vmem [shape: f32[16,1], index: 3, kind: input, shape index: {}]
  %s4 = inlined_call_operand.hbm [shape: f32[16,128], index: 4, kind: output, shape index: {}]
  %s5 = sld [smem:[#allocation0]]
  $region26: #{_ctc_logprobs_impl.3} parent=0
    _
  %s7 = ssub.s32 1, %s5
  %s8 = scalar_select 0, %s7, %s5
  $region1: #{_ctc_logprobs_impl.3} parent=0
    #allocation2 [shape = 'u8[8192]{0}', space=vmem, size = 0x2000, scoped, tag = 'output window, operand 0, single buffered']
    #allocation3 [shape = 's32[1]{0}', space=sflag, size = 0x4, scoped, tag = 'scoped memory for _ctc_logprobs_impl.3']
    %9 = vsyncpa [#allocation3], 0
    // Predicated region
    $region2: #{_ctc_logprobs_impl.3} parent=1 // pred_check
      _
    $region3: #{_ctc_logprobs_impl.3} parent=1 // pred_check_branch
      %11 = sbr.rel (0) target = $region5
    $region4: #{_ctc_logprobs_impl.3} parent=1 // pred_region
      _
    $region5: #{_ctc_logprobs_impl.3} parent=1 // pred_fallthru
      _
    // Predicated region
    $region6: #{_ctc_logprobs_impl.3} parent=1 // pred_check
      _
    $region7: #{_ctc_logprobs_impl.3} parent=1 // pred_check_branch
      %13 = sbr.rel (0) target = $region9
    $region8: #{_ctc_logprobs_impl.3} parent=1 // pred_region
      _
    $region9: #{_ctc_logprobs_impl.3} parent=1 // pred_fallthru
      _
    // Predicated region
    $region10: #{_ctc_logprobs_impl.3} parent=1 // pred_check
      _
    $region11: #{_ctc_logprobs_impl.3} parent=1 // pred_check_branch
      %15 = sbr.rel (0) target = $region13
    $region12: #{_ctc_logprobs_impl.3} parent=1 // pred_region
      _
    $region13: #{_ctc_logprobs_impl.3} parent=1 // pred_fallthru
      _
    // Predicated region
    $region14: #{_ctc_logprobs_impl.3} parent=1 // pred_check
      _
    $region15: #{_ctc_logprobs_impl.3} parent=1 // pred_check_branch
      %17 = sbr.rel (0) target = $region17
    $region16: #{_ctc_logprobs_impl.3} parent=1 // pred_region
      _
    $region17: #{_ctc_logprobs_impl.3} parent=1 // pred_fallthru
      _
    %v18 = vld [vmem:[%s0] sm:$0xff]
    %v19 = vld [vmem:[%s0 + $0x8] sm:$0xff]
    %v20 = vld [vmem:[%s1] sm:$0xff]
    %v21 = vld [vmem:[%s1 + $0x8] sm:$0xff]
    %v22 = vld [vmem:[%s1 + $0x10] sm:$0xff]
    %v23 = vld [vmem:[%s1 + $0x18] sm:$0xff]
    %v24 = vld [vmem:[%s1 + $0x20] sm:$0xff]
    %v25 = vld [vmem:[%s1 + $0x28] sm:$0xff]
    %v26 = vld [vmem:[%s1 + $0x30] sm:$0xff]
    %v27 = vld [vmem:[%s1 + $0x38] sm:$0xff]
    %v28 = vld [vmem:[%s1 + $0x40] sm:$0xff]
    %v29 = vld [vmem:[%s1 + $0x48] sm:$0xff]
    %v30 = vld [vmem:[%s1 + $0x50] sm:$0xff]
    %v31 = vld [vmem:[%s1 + $0x58] sm:$0xff]
    %v32 = vld [vmem:[%s1 + $0x60] sm:$0xff]
    %v33 = vld [vmem:[%s1 + $0x68] sm:$0xff]
    %v34 = vld [vmem:[%s1 + $0x70] sm:$0xff]
    %v35 = vld [vmem:[%s1 + $0x78] sm:$0xff]
    %v36 = vld [vmem:[%s2] sm:$0x1]
    %v38 = vperm.slane %v36, 0
    %40 = vmatpush.msra.mxu0 %v35
    %41 = vmatpush.msra.mxu0 %v34
    %42 = vmatpush.msra.mxu0 %v33
    %43 = vmatpush.msra.mxu0 %v32
    %44 = vmatpush.msra.mxu0 %v31
    %45 = vmatpush.msra.mxu0 %v30
    %46 = vmatpush.msra.mxu0 %v29
    %47 = vmatpush.msra.mxu0 %v28
    %48 = vmatpush.msra.mxu0 %v27
    %49 = vmatpush.msra.mxu0 %v26
    %50 = vmatpush.msra.mxu0 %v25
    %51 = vmatpush.msra.mxu0 %v24
    %52 = vmatpush.msra.mxu0 %v23
    %53 = vmatpush.msra.mxu0 %v22
    %54 = vmatpush.msra.mxu0 %v21
    %55 = vmatpush.msra.mxu0 %v20
    %56 = vmatmul.f32.gmra.mxu0 %v18
    %v57 = vpop.f32.mrf.mxu0
    %v58 = vadd.f32 %v38, %v57
    %59 = vmatmul.f32.gmra.mxu0 %v19
    %v60 = vpop.f32.mrf.mxu0
    %v61 = vadd.f32 %v38, %v60
    %62 = vdwg.mxu0
    %v63 = vld [vmem:[%s3] sm:$0xff]
    %v64 = vld [vmem:[%s3 + $0x8] sm:$0xff]
    %66 = vset.pattern.permute.xlu0 0
    %67 = vperm.xlu0 %66, %v63
    %v68 = vpop.permute.xlu0 %67
    %71 = vset.pattern.permute.xlu0 0
    %72 = vperm.xlu0 %71, %v64
    %v73 = vpop.permute.xlu0 %72
    %v75 = vsub.f32 %v58, %v68
    %v76 = vsub.f32 %v61, %v73
    %77 = vst [vmem:[#allocation2] sm:$0xff] %v75
    %78 = vst [vmem:[#allocation2 + $0x8] sm:$0xff] %v76
    // Predicated region
    $region18: #{_ctc_logprobs_impl.3} parent=1 // pred_check
      _
    $region19: #{_ctc_logprobs_impl.3} parent=1 // pred_check_branch
      %80 = sbr.rel (0) target = $region21
    $region20: #{_ctc_logprobs_impl.3} parent=1 // pred_region
      %82 = vsyncadd [#allocation3], 0
      %s83 = sshll.u32 [#allocation2], 4
      %s84 = int_to_ptr.vmem [resolvable:$true] %s83
      %s85 = sshll.u32 %s4, 4
      %s86 = int_to_ptr.hbm [resolvable:$true] %s85
      %91 = dma.vmem_to_hbm [thread:$0]  %s84, 256, %s86, [#allocation3], 128, 128, 8
    $region21: #{_ctc_logprobs_impl.3} parent=1 // pred_fallthru
      _
    // Predicated region
    $region22: #{_ctc_logprobs_impl.3} parent=1 // pred_check
      _
    $region23: #{_ctc_logprobs_impl.3} parent=1 // pred_check_branch
      %93 = sbr.rel (0) target = $region25
    $region24: #{_ctc_logprobs_impl.3} parent=1 // pred_region
      %95 = dma.done [#allocation3], 256
    $region25: #{_ctc_logprobs_impl.3} parent=1 // pred_fallthru
      _
    %96 = vsyncpa [#allocation3], 1

</llo_original>
